<compile_context>
chip_gen: v6e
topology: v6e:2x2x1
jax: 0.10.0
libtpu: 0.0.40
codegen_flags: <defaults>
</compile_context>

<pallas_src>
import jax
import jax.numpy as jnp
from jax.experimental import pallas as pl
from jax.experimental.pallas import tpu as pltpu


def grn_kernel(x_ref, w1_ref, b1_ref, w2_ref, b2_ref, w3_ref, b3_ref, o_ref):
    x = x_ref[...].astype(jnp.float32)                              # (tm, Dp)

    h = jnp.dot(x, w1_ref[...], preferred_element_type=jnp.float32) + b1_ref[...]
    h = jnp.maximum(h, 0.0)                                          # relu(linear1)

    out = jnp.dot(h, w2_ref[...], preferred_element_type=jnp.float32) + b2_ref[...]

    g = jax.nn.sigmoid(
        jnp.dot(out, w3_ref[...], preferred_element_type=jnp.float32) + b3_ref[...]
    )

    # y = g*out + (1-g)*x  ==  x + g*(out - x)   (one VPU op cheaper)
    o_ref[...] = (x + g * (out - x)).astype(o_ref.dtype)


def _round_up(a, b):
    return ((a + b - 1) // b) * b


def _pick_pack(d):
    """Lane-packing factor: pack p rows so p*d hits the 128-lane width."""
    if d < 128 and 128 % d == 0:
        return 128 // d
    return 1


def _pick_tm(rows, row_bytes):
    """Packed-row tile: multiple of 8, ~2 MiB of x per tile, >=2 grid steps
    whenever the (padded) batch allows it."""
    budget = 2 << 20                                   # 2 MiB x tile
    tm_cap = max(8, ((budget // max(row_bytes, 1)) // 8) * 8)
    if rows <= 8:
        return 8
    half = _round_up((rows + 1) // 2, 8)               # >= 2 grid steps
    return min(tm_cap, half)


def grn_forward(x, w1, b1, w2, b2, w3, b3):
    """x: (B, D_in); w1: (H, D_in); w2: (D_out, H); w3: (D_out, D_out)
    (nn.Linear layout).  Returns (B, D_out)."""
    B, D_in = x.shape
    H = w1.shape[0]
    D_out = w2.shape[0]
    assert D_in == D_out, "GRN residual requires input_size == output_size"
    D = D_in

    # ---- lane packing: p batch rows -> one 128-lane row --------------------
    p = _pick_pack(D)
    Dp = p * D
    Hp = p * H

    # Block-diagonal weights (built once at trace time; tiny), pre-transposed
    # to (in, out) so the kernel contracts x @ W with no in-kernel re-layout.
    eye_p = jnp.eye(p, dtype=w1.dtype)
    w1b = jnp.kron(eye_p, w1.T)          # (Dp, Hp)
    w2b = jnp.kron(eye_p, w2.T)          # (Hp, Dp)
    w3b = jnp.kron(eye_p, w3.T)          # (Dp, Dp)
    b1b = jnp.tile(b1, (p,)).reshape(1, Hp)
    b2b = jnp.tile(b2, (p,)).reshape(1, Dp)
    b3b = jnp.tile(b3, (p,)).reshape(1, Dp)

    # ---- tile selection + wrapper-side padding (no single-block fallback) --
    rows = -(-B // p)                                  # packed rows before pad
    row_bytes = Dp * x.dtype.itemsize
    tm = _pick_tm(rows, row_bytes)
    rows_pad = _round_up(max(rows, tm), tm)
    B_pad = rows_pad * p

    x_p = x if B_pad == B else jnp.pad(x, ((0, B_pad - B), (0, 0)))
    x_packed = x_p.reshape(rows_pad, Dp)

    grid = (rows_pad // tm,)

    # Constant index_map -> weights/biases stay VMEM-resident across steps.
    def resident(shape):
        return pl.BlockSpec(shape, lambda i: (0,) * len(shape))

    y_packed = pl.pallas_call(
        grn_kernel,
        out_shape=jax.ShapeDtypeStruct((rows_pad, Dp), x.dtype),
        grid=grid,
        in_specs=[
            pl.BlockSpec((tm, Dp), lambda i: (i, 0)),  # x tile (pipelined)
            resident((Dp, Hp)),                        # W1 (block-diag, pre-T)
            resident((1, Hp)),                         # b1
            resident((Hp, Dp)),                        # W2
            resident((1, Dp)),                         # b2
            resident((Dp, Dp)),                        # W3
            resident((1, Dp)),                         # b3
        ],
        out_specs=pl.BlockSpec((tm, Dp), lambda i: (i, 0)),
        compiler_params=pltpu.CompilerParams(
            dimension_semantics=("parallel",),
            vmem_limit_bytes=32 * 1024 * 1024,
        ),
    )(x_packed, w1b, b1b, w2b, b2b, w3b, b3b)

    return y_packed.reshape(B_pad, D)[:B]


def grn_reference(x, w1, b1, w2, b2, w3, b3):
    h = jax.nn.relu(x @ w1.T + b1)
    out = h @ w2.T + b2
    g = jax.nn.sigmoid(out @ w3.T + b3)
    return g * out + (1.0 - g) * x


if __name__ == "__main__":
    # Small shapes: batch=8, input_size=output_size=32, hidden_size=64.
    B, D_in, H, D_out = 8, 32, 64, 32

    key = jax.random.PRNGKey(0)
    kx, k1, k2, k3, k4, k5, k6 = jax.random.split(key, 7)

    x = jax.random.normal(kx, (B, D_in), dtype=jnp.float32)

    # Deterministic parameter init (roughly matching nn.Linear scale).
    w1 = jax.random.normal(k1, (H, D_in), dtype=jnp.float32) * (1.0 / jnp.sqrt(D_in))
    b1 = jax.random.normal(k2, (H,), dtype=jnp.float32) * 0.01
    w2 = jax.random.normal(k3, (D_out, H), dtype=jnp.float32) * (1.0 / jnp.sqrt(H))
    b2 = jax.random.normal(k4, (D_out,), dtype=jnp.float32) * 0.01
    w3 = jax.random.normal(k5, (D_out, D_out), dtype=jnp.float32) * (1.0 / jnp.sqrt(D_out))
    b3 = jax.random.normal(k6, (D_out,), dtype=jnp.float32) * 0.01

    y = grn_forward(x, w1, b1, w2, b2, w3, b3)
    jax.block_until_ready(y)

    y_ref = grn_reference(x, w1, b1, w2, b2, w3, b3)
    assert y.shape == (B, D_out)
    assert jnp.allclose(y, y_ref, atol=1e-5, rtol=1e-5), "mismatch vs reference"

    # Multi-step grid / odd batch (exercises padding + lane-packed tiling).
    B2 = 1000
    x2 = jax.random.normal(jax.random.PRNGKey(1), (B2, D_in), dtype=jnp.float32)
    y2 = grn_forward(x2, w1, b1, w2, b2, w3, b3)
    jax.block_until_ready(y2)
    y2_ref = grn_reference(x2, w1, b1, w2, b2, w3, b3)
    assert y2.shape == (B2, D_out)
    assert jnp.allclose(y2, y2_ref, atol=1e-5, rtol=1e-5), "mismatch (tiled path)"

    print("KERNEL_OK")
</pallas_src>

<mosaic_0001>
module attributes {stable_mosaic.version = 11 : i64} {
  func.func @grn_kernel(%arg0: i32, %arg1: memref<8x128xf32, #tpu.memory_space<vmem>>, %arg2: memref<128x256xf32, #tpu.memory_space<vmem>>, %arg3: memref<1x256xf32, #tpu.memory_space<vmem>>, %arg4: memref<256x128xf32, #tpu.memory_space<vmem>>, %arg5: memref<1x128xf32, #tpu.memory_space<vmem>>, %arg6: memref<128x128xf32, #tpu.memory_space<vmem>>, %arg7: memref<1x128xf32, #tpu.memory_space<vmem>>, %arg8: memref<8x128xf32, #tpu.memory_space<vmem>>) attributes {dimension_semantics = [#tpu.dimension_semantics<parallel>], iteration_bounds = array<i64: 1>, scalar_prefetch = 0 : i64, scratch_operands = 0 : i64, tpu.core_type = #tpu.core_type<tc>, window_params = [{transform_indices = @transform_0, window_bounds = array<i64: 8, 128>}, {pipeline_mode = #tpu.pipeline_mode<synchronous>, transform_indices = @transform_1, window_bounds = array<i64: 128, 256>}, {pipeline_mode = #tpu.pipeline_mode<synchronous>, transform_indices = @transform_2, window_bounds = array<i64: 1, 256>}, {pipeline_mode = #tpu.pipeline_mode<synchronous>, transform_indices = @transform_3, window_bounds = array<i64: 256, 128>}, {pipeline_mode = #tpu.pipeline_mode<synchronous>, transform_indices = @transform_4, window_bounds = array<i64: 1, 128>}, {pipeline_mode = #tpu.pipeline_mode<synchronous>, transform_indices = @transform_5, window_bounds = array<i64: 128, 128>}, {pipeline_mode = #tpu.pipeline_mode<synchronous>, transform_indices = @transform_6, window_bounds = array<i64: 1, 128>}, {transform_indices = @transform_7, window_bounds = array<i64: 8, 128>}]} {
    %c0 = arith.constant 0 : index
    %c0_0 = arith.constant 0 : index
    %0 = vector.load %arg1[%c0, %c0_0] : memref<8x128xf32, #tpu.memory_space<vmem>>, vector<8x128xf32>
    %c0_1 = arith.constant 0 : index
    %c0_2 = arith.constant 0 : index
    %1 = vector.load %arg2[%c0_1, %c0_2] : memref<128x256xf32, #tpu.memory_space<vmem>>, vector<128x256xf32>
    %cst = arith.constant dense<0.000000e+00> : vector<8x256xf32>
    %2 = tpu.matmul %0, %1, %cst {dimension_numbers = #tpu.dot_dimension_numbers<[1], [0], [0], [1], [0, 0, 1, 1], [], []>} : vector<8x128xf32>, vector<128x256xf32>, vector<8x256xf32> -> vector<8x256xf32>
    %c0_3 = arith.constant 0 : index
    %c0_4 = arith.constant 0 : index
    %3 = vector.load %arg3[%c0_3, %c0_4] : memref<1x256xf32, #tpu.memory_space<vmem>>, vector<1x256xf32>
    %4 = vector.broadcast %3 : vector<1x256xf32> to vector<8x256xf32>
    %5 = arith.addf %2, %4 : vector<8x256xf32>
    %cst_5 = arith.constant 0.000000e+00 : f32
    %6 = vector.broadcast %cst_5 : f32 to vector<8x256xf32>
    %7 = arith.maximumf %5, %6 : vector<8x256xf32>
    %c0_6 = arith.constant 0 : index
    %c0_7 = arith.constant 0 : index
    %8 = vector.load %arg4[%c0_6, %c0_7] : memref<256x128xf32, #tpu.memory_space<vmem>>, vector<256x128xf32>
    %cst_8 = arith.constant dense<0.000000e+00> : vector<8x128xf32>
    %9 = tpu.matmul %7, %8, %cst_8 {dimension_numbers = #tpu.dot_dimension_numbers<[1], [0], [0], [1], [0, 0, 1, 1], [], []>} : vector<8x256xf32>, vector<256x128xf32>, vector<8x128xf32> -> vector<8x128xf32>
    %c0_9 = arith.constant 0 : index
    %c0_10 = arith.constant 0 : index
    %10 = vector.load %arg5[%c0_9, %c0_10] : memref<1x128xf32, #tpu.memory_space<vmem>>, vector<1x128xf32>
    %11 = vector.broadcast %10 : vector<1x128xf32> to vector<8x128xf32>
    %12 = arith.addf %9, %11 : vector<8x128xf32>
    %c0_11 = arith.constant 0 : index
    %c0_12 = arith.constant 0 : index
    %13 = vector.load %arg6[%c0_11, %c0_12] : memref<128x128xf32, #tpu.memory_space<vmem>>, vector<128x128xf32>
    %cst_13 = arith.constant dense<0.000000e+00> : vector<8x128xf32>
    %14 = tpu.matmul %12, %13, %cst_13 {dimension_numbers = #tpu.dot_dimension_numbers<[1], [0], [0], [1], [0, 0, 1, 1], [], []>} : vector<8x128xf32>, vector<128x128xf32>, vector<8x128xf32> -> vector<8x128xf32>
    %c0_14 = arith.constant 0 : index
    %c0_15 = arith.constant 0 : index
    %15 = vector.load %arg7[%c0_14, %c0_15] : memref<1x128xf32, #tpu.memory_space<vmem>>, vector<1x128xf32>
    %16 = vector.broadcast %15 : vector<1x128xf32> to vector<8x128xf32>
    %17 = arith.addf %14, %16 : vector<8x128xf32>
    %18 = arith.negf %17 : vector<8x128xf32>
    %19 = math.exp %18 : vector<8x128xf32>
    %cst_16 = arith.constant 1.000000e+00 : f32
    %20 = vector.broadcast %cst_16 : f32 to vector<8x128xf32>
    %21 = arith.addf %20, %19 : vector<8x128xf32>
    %22 = arith.divf %20, %21 : vector<8x128xf32>
    %23 = arith.subf %12, %0 : vector<8x128xf32>
    %24 = arith.mulf %22, %23 : vector<8x128xf32>
    %25 = arith.addf %0, %24 : vector<8x128xf32>
    %c0_17 = arith.constant 0 : index
    %c0_18 = arith.constant 0 : index
    %26 = vector.load %arg8[%c0_17, %c0_18] : memref<8x128xf32, #tpu.memory_space<vmem>>, vector<8x128xf32>
    tpu.vector_store %arg8[%c0_17, %c0_18], %25 {strides = array<i32>} : memref<8x128xf32, #tpu.memory_space<vmem>>, vector<8x128xf32>,
    return
  }
  func.func @transform_0(%arg0: i32) -> (i32, i32) {
    %c0_i32 = arith.constant 0 : i32
    %c0_i32_0 = arith.constant 0 : i32
    return %arg0, %c0_i32 : i32, i32
  }
  func.func @transform_1(%arg0: i32) -> (i32, i32) {
    %c0_i32 = arith.constant 0 : i32
    %c0_i32_0 = arith.constant 0 : i32
    %c0_i32_1 = arith.constant 0 : i32
    return %c0_i32, %c0_i32_0 : i32, i32
  }
  func.func @transform_2(%arg0: i32) -> (i32, i32) {
    %c0_i32 = arith.constant 0 : i32
    %c0_i32_0 = arith.constant 0 : i32
    %c0_i32_1 = arith.constant 0 : i32
    return %c0_i32, %c0_i32_0 : i32, i32
  }
  func.func @transform_3(%arg0: i32) -> (i32, i32) {
    %c0_i32 = arith.constant 0 : i32
    %c0_i32_0 = arith.constant 0 : i32
    %c0_i32_1 = arith.constant 0 : i32
    return %c0_i32, %c0_i32_0 : i32, i32
  }
  func.func @transform_4(%arg0: i32) -> (i32, i32) {
    %c0_i32 = arith.constant 0 : i32
    %c0_i32_0 = arith.constant 0 : i32
    %c0_i32_1 = arith.constant 0 : i32
    return %c0_i32, %c0_i32_0 : i32, i32
  }
  func.func @transform_5(%arg0: i32) -> (i32, i32) {
    %c0_i32 = arith.constant 0 : i32
    %c0_i32_0 = arith.constant 0 : i32
    %c0_i32_1 = arith.constant 0 : i32
    return %c0_i32, %c0_i32_0 : i32, i32
  }
  func.func @transform_6(%arg0: i32) -> (i32, i32) {
    %c0_i32 = arith.constant 0 : i32
    %c0_i32_0 = arith.constant 0 : i32
    %c0_i32_1 = arith.constant 0 : i32
    return %c0_i32, %c0_i32_0 : i32, i32
  }
  func.func @transform_7(%arg0: i32) -> (i32, i32) {
    %c0_i32 = arith.constant 0 : i32
    %c0_i32_0 = arith.constant 0 : i32
    return %arg0, %c0_i32 : i32, i32
  }
}

</mosaic_0001>

<llo_original>
// kernel: tpu_custom_call.1
$region0: #{tpu_custom_call.1}
  #allocation0 [shape = 'u32[]', space=smem, size = 0x4, offset = 0x4, fixed_abs, tag = 'smem constant byte address 0x4 - core index']
  #allocation1 [shape = 'u32[144,128]{1,0:T(1,128)}', space=vmem, size = 0x12000, scoped, tag = 'internal scratch']
  %s0 = inlined_call_operand.hbm [shape: f32[8,128], index: 0, kind: input, shape index: {}]
  %s1 = inlined_call_operand.hbm [shape: f32[128,256], index: 1, kind: input, shape index: {}]
  %s2 = inlined_call_operand.vmem [shape: f32[1,256], index: 2, kind: input, shape index: {}]
  %s3 = inlined_call_operand.hbm [shape: f32[256,128], index: 3, kind: input, shape index: {}]
  %s4 = inlined_call_operand.vmem [shape: f32[1,128], index: 4, kind: input, shape index: {}]
  %s5 = inlined_call_operand.hbm [shape: f32[128,128], index: 5, kind: input, shape index: {}]
  %s6 = inlined_call_operand.vmem [shape: f32[1,128], index: 6, kind: input, shape index: {}]
  %s7 = inlined_call_operand.hbm [shape: f32[8,128], index: 7, kind: output, shape index: {}]
  %s8 = sld [smem:[#allocation0]]
  $region54: #{tpu_custom_call.1} parent=0
    _
  %s10 = ssub.s32 1, %s8
  %s11 = scalar_select 0, %s10, %s8
  $region1: #{tpu_custom_call.1} parent=0
    #allocation2 [shape = 'u8[4096]{0}', space=vmem, size = 0x1000, scoped, tag = 'input window, operand 0, single buffered']
    #allocation3 [shape = 's32[1]{0}', space=sflag, size = 0x4, scoped, tag = 'scoped memory for tpu_custom_call.1']
    #allocation4 [shape = 's32[1]{0}', space=sflag, size = 0x4, scoped, tag = 'scoped memory for tpu_custom_call.1']
    #allocation5 [shape = 'u8[131072]{0}', space=vmem, size = 0x20000, scoped, tag = 'input window, operand 1, single buffered']
    #allocation6 [shape = 's32[1]{0}', space=sflag, size = 0x4, scoped, tag = 'scoped memory for tpu_custom_call.1']
    #allocation7 [shape = 'u8[131072]{0}', space=vmem, size = 0x20000, scoped, tag = 'input window, operand 3, single buffered']
    #allocation8 [shape = 'u8[65536]{0}', space=vmem, size = 0x10000, scoped, tag = 'input window, operand 5, single buffered']
    #allocation9 [shape = 's32[1]{0}', space=sflag, size = 0x4, scoped, tag = 'scoped memory for tpu_custom_call.1']
    #allocation10 [shape = 'u8[4096]{0}', space=vmem, size = 0x1000, scoped, tag = 'output window, operand 0, single buffered']
    %12 = vsyncpa [#allocation3], 0
    %13 = vsyncpa [#allocation6], 0
    %14 = vsyncpa [#allocation9], 0
    %15 = vsyncpa [#allocation4], 0
    // Predicated region
    $region2: #{tpu_custom_call.1} parent=1 // pred_check
      _
    $region3: #{tpu_custom_call.1} parent=1 // pred_check_branch
      %17 = sbr.rel (0) target = $region5
    $region4: #{tpu_custom_call.1} parent=1 // pred_region
      %s19 = ssub.s32 128, 128
      %20 = vsyncadd [#allocation3], %s19
      %s22 = sshll.u32 [#allocation2], 4
      %s23 = int_to_ptr.vmem [resolvable:$true] %s22
      %25 = dma.hbm_to_vmem [thread:$0]  %s0, 128, %s23, [#allocation3]
    $region5: #{tpu_custom_call.1} parent=1 // pred_fallthru
      _
    // Predicated region
    $region6: #{tpu_custom_call.1} parent=1 // pred_check
      _
    $region7: #{tpu_custom_call.1} parent=1 // pred_check_branch
      %27 = sbr.rel (0) target = $region9
    $region8: #{tpu_custom_call.1} parent=1 // pred_region
      %s29 = ssub.s32 4096, 4096
      %30 = vsyncadd [#allocation6], %s29
      %s31 = sshll.u32 [#allocation5], 4
      %s32 = int_to_ptr.vmem [resolvable:$true] %s31
      %37 = dma.hbm_to_vmem [thread:$0]  %s1, 4096, %s32, [#allocation6], 256, 256, 16
    $region9: #{tpu_custom_call.1} parent=1 // pred_fallthru
      _
    // Predicated region
    $region10: #{tpu_custom_call.1} parent=1 // pred_check
      _
    $region11: #{tpu_custom_call.1} parent=1 // pred_check_branch
      %39 = sbr.rel (0) target = $region13
    $region12: #{tpu_custom_call.1} parent=1 // pred_region
      _
    $region13: #{tpu_custom_call.1} parent=1 // pred_fallthru
      _
    // Predicated region
    $region14: #{tpu_custom_call.1} parent=1 // pred_check
      _
    $region15: #{tpu_custom_call.1} parent=1 // pred_check_branch
      %41 = sbr.rel (0) target = $region17
    $region16: #{tpu_custom_call.1} parent=1 // pred_region
      %s43 = ssub.s32 4096, 4096
      %44 = vsyncadd [#allocation6], %s43
      %s45 = sshll.u32 [#allocation7], 4
      %s46 = int_to_ptr.vmem [resolvable:$true] %s45
      %51 = dma.hbm_to_vmem [thread:$0]  %s3, 4096, %s46, [#allocation6], 128, 128, 8
    $region17: #{tpu_custom_call.1} parent=1 // pred_fallthru
      _
    // Predicated region
    $region18: #{tpu_custom_call.1} parent=1 // pred_check
      _
    $region19: #{tpu_custom_call.1} parent=1 // pred_check_branch
      %53 = sbr.rel (0) target = $region21
    $region20: #{tpu_custom_call.1} parent=1 // pred_region
      _
    $region21: #{tpu_custom_call.1} parent=1 // pred_fallthru
      _
    // Predicated region
    $region22: #{tpu_custom_call.1} parent=1 // pred_check
      _
    $region23: #{tpu_custom_call.1} parent=1 // pred_check_branch
      %55 = sbr.rel (0) target = $region25
    $region24: #{tpu_custom_call.1} parent=1 // pred_region
      %s57 = ssub.s32 2048, 2048
      %58 = vsyncadd [#allocation9], %s57
      %s59 = sshll.u32 [#allocation8], 4
      %s60 = int_to_ptr.vmem [resolvable:$true] %s59
      %65 = dma.hbm_to_vmem [thread:$0]  %s5, 2048, %s60, [#allocation9], 128, 128, 8
    $region25: #{tpu_custom_call.1} parent=1 // pred_fallthru
      _
    // Predicated region
    $region26: #{tpu_custom_call.1} parent=1 // pred_check
      _
    $region27: #{tpu_custom_call.1} parent=1 // pred_check_branch
      %67 = sbr.rel (0) target = $region29
    $region28: #{tpu_custom_call.1} parent=1 // pred_region
      _
    $region29: #{tpu_custom_call.1} parent=1 // pred_fallthru
      _
    // Predicated region
    $region30: #{tpu_custom_call.1} parent=1 // pred_check
      _
    $region31: #{tpu_custom_call.1} parent=1 // pred_check_branch
      %69 = sbr.rel (0) target = $region33
    $region32: #{tpu_custom_call.1} parent=1 // pred_region
      %70 = dma.done [#allocation3], 128
    $region33: #{tpu_custom_call.1} parent=1 // pred_fallthru
      _
    // Predicated region
    $region34: #{tpu_custom_call.1} parent=1 // pred_check
      _
    $region35: #{tpu_custom_call.1} parent=1 // pred_check_branch
      %72 = sbr.rel (0) target = $region37
    $region36: #{tpu_custom_call.1} parent=1 // pred_region
      %73 = dma.done [#allocation6], 4096
    $region37: #{tpu_custom_call.1} parent=1 // pred_fallthru
      _
    // Predicated region
    $region38: #{tpu_custom_call.1} parent=1 // pred_check
      _
    $region39: #{tpu_custom_call.1} parent=1 // pred_check_branch
      %75 = sbr.rel (0) target = $region41
    $region40: #{tpu_custom_call.1} parent=1 // pred_region
      %76 = dma.done [#allocation6], 4096
    $region41: #{tpu_custom_call.1} parent=1 // pred_fallthru
      _
    // Predicated region
    $region42: #{tpu_custom_call.1} parent=1 // pred_check
      _
    $region43: #{tpu_custom_call.1} parent=1 // pred_check_branch
      %78 = sbr.rel (0) target = $region45
    $region44: #{tpu_custom_call.1} parent=1 // pred_region
      %79 = dma.done [#allocation9], 2048
    $region45: #{tpu_custom_call.1} parent=1 // pred_fallthru
      _
    %v80 = vld [vmem:[#allocation2] sm:$0xff]
    %v81 = vld [vmem:[#allocation5] sm:$0xff]
    %v82 = vld [vmem:[#allocation5 + $0x8] sm:$0xff]
    %v83 = vld [vmem:[#allocation5 + $0x10] sm:$0xff]
    %v84 = vld [vmem:[#allocation5 + $0x18] sm:$0xff]
    %v85 = vld [vmem:[#allocation5 + $0x20] sm:$0xff]
    %v86 = vld [vmem:[#allocation5 + $0x28] sm:$0xff]
    %v87 = vld [vmem:[#allocation5 + $0x30] sm:$0xff]
    %v88 = vld [vmem:[#allocation5 + $0x38] sm:$0xff]
    %v89 = vld [vmem:[#allocation5 + $0x40] sm:$0xff]
    %v90 = vld [vmem:[#allocation5 + $0x48] sm:$0xff]
    %v91 = vld [vmem:[#allocation5 + $0x50] sm:$0xff]
    %v92 = vld [vmem:[#allocation5 + $0x58] sm:$0xff]
    %v93 = vld [vmem:[#allocation5 + $0x60] sm:$0xff]
    %v94 = vld [vmem:[#allocation5 + $0x68] sm:$0xff]
    %v95 = vld [vmem:[#allocation5 + $0x70] sm:$0xff]
    %v96 = vld [vmem:[#allocation5 + $0x78] sm:$0xff]
    %v97 = vld [vmem:[#allocation5 + $0x80] sm:$0xff]
    %v98 = vld [vmem:[#allocation5 + $0x88] sm:$0xff]
    %v99 = vld [vmem:[#allocation5 + $0x90] sm:$0xff]
    %v100 = vld [vmem:[#allocation5 + $0x98] sm:$0xff]
    %v101 = vld [vmem:[#allocation5 + $0xa0] sm:$0xff]
    %v102 = vld [vmem:[#allocation5 + $0xa8] sm:$0xff]
    %v103 = vld [vmem:[#allocation5 + $0xb0] sm:$0xff]
    %v104 = vld [vmem:[#allocation5 + $0xb8] sm:$0xff]
    %v105 = vld [vmem:[#allocation5 + $0xc0] sm:$0xff]
    %v106 = vld [vmem:[#allocation5 + $0xc8] sm:$0xff]
    %v107 = vld [vmem:[#allocation5 + $0xd0] sm:$0xff]
    %v108 = vld [vmem:[#allocation5 + $0xd8] sm:$0xff]
    %v109 = vld [vmem:[#allocation5 + $0xe0] sm:$0xff]
    %v110 = vld [vmem:[#allocation5 + $0xe8] sm:$0xff]
    %v111 = vld [vmem:[#allocation5 + $0xf0] sm:$0xff]
    %v112 = vld [vmem:[#allocation5 + $0xf8] sm:$0xff]
    %v113 = vld [vmem:[%s2] sm:$0x3]
    %v115 = vlaneseq
    %v116 = vshrl.u32 %v115, 7
    %v117 = vsub.s32 0, %v116
    %v118 = vrot.slane %v113, %v117
    %v119 = vlaneseq
    %v120 = vshrl.u32 %v119, 7
    %v121 = vsub.s32 1, %v120
    %v122 = vrot.slane %v113, %v121
    %125 = vmatprep.subr.mxu0 %v112
    %126 = vmatpush1.msra.mxu0 %v111
    %127 = vmatprep.subr.mxu0 %v110
    %128 = vmatpush1.msra.mxu0 %v109
    %129 = vmatprep.subr.mxu0 %v108
    %130 = vmatpush1.msra.mxu0 %v107
    %131 = vmatprep.subr.mxu0 %v106
    %132 = vmatpush1.msra.mxu0 %v105
    %133 = vmatprep.subr.mxu0 %v104
    %134 = vmatpush1.msra.mxu0 %v103
    %135 = vmatprep.subr.mxu0 %v102
    %136 = vmatpush1.msra.mxu0 %v101
    %137 = vmatprep.subr.mxu0 %v100
    %138 = vmatpush1.msra.mxu0 %v99
    %139 = vmatprep.subr.mxu0 %v98
    %140 = vmatpush1.msra.mxu0 %v97
    %141 = vmatprep.subr.mxu0 %v96
    %142 = vmatpush1.msra.mxu0 %v95
    %143 = vmatprep.subr.mxu0 %v94
    %144 = vmatpush1.msra.mxu0 %v93
    %145 = vmatprep.subr.mxu0 %v92
    %146 = vmatpush1.msra.mxu0 %v91
    %147 = vmatprep.subr.mxu0 %v90
    %148 = vmatpush1.msra.mxu0 %v89
    %149 = vmatprep.subr.mxu0 %v88
    %150 = vmatpush1.msra.mxu0 %v87
    %151 = vmatprep.subr.mxu0 %v86
    %152 = vmatpush1.msra.mxu0 %v85
    %153 = vmatprep.subr.mxu0 %v84
    %154 = vmatpush1.msra.mxu0 %v83
    %155 = vmatprep.subr.mxu0 %v82
    %156 = vmatpush1.msra.mxu0 %v81
    %157 = vmatprep.subr.mxu0 0.0
    %158 = vmatpush2.msra.mxu0 0.0
    %159 = vmatprep.subr.mxu0 0.0
    %160 = vmatpush2.msra.mxu0 0.0
    %161 = vmatprep.subr.mxu0 0.0
    %162 = vmatpush2.msra.mxu0 0.0
    %163 = vmatprep.subr.mxu0 0.0
    %164 = vmatpush2.msra.mxu0 0.0
    %165 = vmatprep.subr.mxu0 0.0
    %166 = vmatpush2.msra.mxu0 0.0
    %167 = vmatprep.subr.mxu0 0.0
    %168 = vmatpush2.msra.mxu0 0.0
    %169 = vmatprep.subr.mxu0 0.0
    %170 = vmatpush2.msra.mxu0 0.0
    %171 = vmatprep.subr.mxu0 0.0
    %172 = vmatpush2.msra.mxu0 0.0
    %173 = vmatprep.subr.mxu0 0.0
    %174 = vmatpush2.msra.mxu0 0.0
    %175 = vmatprep.subr.mxu0 0.0
    %176 = vmatpush2.msra.mxu0 0.0
    %177 = vmatprep.subr.mxu0 0.0
    %178 = vmatpush2.msra.mxu0 0.0
    %179 = vmatprep.subr.mxu0 0.0
    %180 = vmatpush2.msra.mxu0 0.0
    %181 = vmatprep.subr.mxu0 0.0
    %182 = vmatpush2.msra.mxu0 0.0
    %183 = vmatprep.subr.mxu0 0.0
    %184 = vmatpush2.msra.mxu0 0.0
    %185 = vmatprep.subr.mxu0 0.0
    %186 = vmatpush2.msra.mxu0 0.0
    %187 = vmatprep.subr.mxu0 0.0
    %188 = vmatpush2.msra.mxu0 0.0
    %189 = vmatprep.mubr.f32.mxu0 0.0
    %190 = vmatmul.mubr.f32.gmra.mxu0 %v80
    %v191 = vpop.f32.mrf.mxu0
    %v192 = vadd.f32 %v118, %v191
    %v193 = vpop.f32.mrf.mxu0
    %v194 = vadd.f32 %v122, %v193
    %195 = vdwg.mxu0
    %v196 = vmax.f32 %v192, 0.0
    %v197 = vmax.f32 %v194, 0.0
    %v198 = vld [vmem:[#allocation7] sm:$0xff]
    %v199 = vld [vmem:[#allocation7 + $0x8] sm:$0xff]
    %v200 = vld [vmem:[#allocation7 + $0x10] sm:$0xff]
    %v201 = vld [vmem:[#allocation7 + $0x18] sm:$0xff]
    %v202 = vld [vmem:[#allocation7 + $0x20] sm:$0xff]
    %v203 = vld [vmem:[#allocation7 + $0x28] sm:$0xff]
    %v204 = vld [vmem:[#allocation7 + $0x30] sm:$0xff]
    %v205 = vld [vmem:[#allocation7 + $0x38] sm:$0xff]
    %v206 = vld [vmem:[#allocation7 + $0x40] sm:$0xff]
    %v207 = vld [vmem:[#allocation7 + $0x48] sm:$0xff]
    %v208 = vld [vmem:[#allocation7 + $0x50] sm:$0xff]
    %v209 = vld [vmem:[#allocation7 + $0x58] sm:$0xff]
    %v210 = vld [vmem:[#allocation7 + $0x60] sm:$0xff]
    %v211 = vld [vmem:[#allocation7 + $0x68] sm:$0xff]
    %v212 = vld [vmem:[#allocation7 + $0x70] sm:$0xff]
    %v213 = vld [vmem:[#allocation7 + $0x78] sm:$0xff]
    %v214 = vld [vmem:[#allocation7 + $0x80] sm:$0xff]
    %v215 = vld [vmem:[#allocation7 + $0x88] sm:$0xff]
    %v216 = vld [vmem:[#allocation7 + $0x90] sm:$0xff]
    %v217 = vld [vmem:[#allocation7 + $0x98] sm:$0xff]
    %v218 = vld [vmem:[#allocation7 + $0xa0] sm:$0xff]
    %v219 = vld [vmem:[#allocation7 + $0xa8] sm:$0xff]
    %v220 = vld [vmem:[#allocation7 + $0xb0] sm:$0xff]
    %v221 = vld [vmem:[#allocation7 + $0xb8] sm:$0xff]
    %v222 = vld [vmem:[#allocation7 + $0xc0] sm:$0xff]
    %v223 = vld [vmem:[#allocation7 + $0xc8] sm:$0xff]
    %v224 = vld [vmem:[#allocation7 + $0xd0] sm:$0xff]
    %v225 = vld [vmem:[#allocation7 + $0xd8] sm:$0xff]
    %v226 = vld [vmem:[#allocation7 + $0xe0] sm:$0xff]
    %v227 = vld [vmem:[#allocation7 + $0xe8] sm:$0xff]
    %v228 = vld [vmem:[#allocation7 + $0xf0] sm:$0xff]
    %v229 = vld [vmem:[#allocation7 + $0xf8] sm:$0xff]
    %v230 = vld [vmem:[%s4] sm:$0x1]
    %v232 = vlaneseq
    %v233 = vshrl.u32 %v232, 7
    %v234 = vsub.s32 0, %v233
    %v235 = vrot.slane %v230, %v234
    %237 = vmatprep.subr.mxu0 0.0
    %238 = vmatpush1.msra.mxu0 %v213
    %239 = vmatprep.subr.mxu0 0.0
    %240 = vmatpush1.msra.mxu0 %v212
    %241 = vmatprep.subr.mxu0 0.0
    %242 = vmatpush1.msra.mxu0 %v211
    %243 = vmatprep.subr.mxu0 0.0
    %244 = vmatpush1.msra.mxu0 %v210
    %245 = vmatprep.subr.mxu0 0.0
    %246 = vmatpush1.msra.mxu0 %v209
    %247 = vmatprep.subr.mxu0 0.0
    %248 = vmatpush1.msra.mxu0 %v208
    %249 = vmatprep.subr.mxu0 0.0
    %250 = vmatpush1.msra.mxu0 %v207
    %251 = vmatprep.subr.mxu0 0.0
    %252 = vmatpush1.msra.mxu0 %v206
    %253 = vmatprep.subr.mxu0 0.0
    %254 = vmatpush1.msra.mxu0 %v205
    %255 = vmatprep.subr.mxu0 0.0
    %256 = vmatpush1.msra.mxu0 %v204
    %257 = vmatprep.subr.mxu0 0.0
    %258 = vmatpush1.msra.mxu0 %v203
    %259 = vmatprep.subr.mxu0 0.0
    %260 = vmatpush1.msra.mxu0 %v202
    %261 = vmatprep.subr.mxu0 0.0
    %262 = vmatpush1.msra.mxu0 %v201
    %263 = vmatprep.subr.mxu0 0.0
    %264 = vmatpush1.msra.mxu0 %v200
    %265 = vmatprep.subr.mxu0 0.0
    %266 = vmatpush1.msra.mxu0 %v199
    %267 = vmatprep.subr.mxu0 0.0
    %268 = vmatpush1.msra.mxu0 %v198
    %269 = vmatprep.subr.mxu0 0.0
    %270 = vmatpush2.msra.mxu0 %v229
    %271 = vmatprep.subr.mxu0 0.0
    %272 = vmatpush2.msra.mxu0 %v228
    %273 = vmatprep.subr.mxu0 0.0
    %274 = vmatpush2.msra.mxu0 %v227
    %275 = vmatprep.subr.mxu0 0.0
    %276 = vmatpush2.msra.mxu0 %v226
    %277 = vmatprep.subr.mxu0 0.0
    %278 = vmatpush2.msra.mxu0 %v225
    %279 = vmatprep.subr.mxu0 0.0
    %280 = vmatpush2.msra.mxu0 %v224
    %281 = vmatprep.subr.mxu0 0.0
    %282 = vmatpush2.msra.mxu0 %v223
    %283 = vmatprep.subr.mxu0 0.0
    %284 = vmatpush2.msra.mxu0 %v222
    %285 = vmatprep.subr.mxu0 0.0
    %286 = vmatpush2.msra.mxu0 %v221
    %287 = vmatprep.subr.mxu0 0.0
    %288 = vmatpush2.msra.mxu0 %v220
    %289 = vmatprep.subr.mxu0 0.0
    %290 = vmatpush2.msra.mxu0 %v219
    %291 = vmatprep.subr.mxu0 0.0
    %292 = vmatpush2.msra.mxu0 %v218
    %293 = vmatprep.subr.mxu0 0.0
    %294 = vmatpush2.msra.mxu0 %v217
    %295 = vmatprep.subr.mxu0 0.0
    %296 = vmatpush2.msra.mxu0 %v216
    %297 = vmatprep.subr.mxu0 0.0
    %298 = vmatpush2.msra.mxu0 %v215
    %299 = vmatprep.subr.mxu0 0.0
    %300 = vmatpush2.msra.mxu0 %v214
    %301 = vmatprep.mubr.f32.mxu0 %v197
    %302 = vmatmul.mubr.f32.gmra.mxu0 %v196
    %v303 = vpop.f32.mrf.mxu0
    %v304 = vadd.f32 %v235, %v303
    %v305 = vpop.f32.mrf.mxu0
    %306 = vdwg.mxu0
    %v307 = vld [vmem:[#allocation8] sm:$0xff]
    %v308 = vld [vmem:[#allocation8 + $0x8] sm:$0xff]
    %v309 = vld [vmem:[#allocation8 + $0x10] sm:$0xff]
    %v310 = vld [vmem:[#allocation8 + $0x18] sm:$0xff]
    %v311 = vld [vmem:[#allocation8 + $0x20] sm:$0xff]
    %v312 = vld [vmem:[#allocation8 + $0x28] sm:$0xff]
    %v313 = vld [vmem:[#allocation8 + $0x30] sm:$0xff]
    %v314 = vld [vmem:[#allocation8 + $0x38] sm:$0xff]
    %v315 = vld [vmem:[#allocation8 + $0x40] sm:$0xff]
    %v316 = vld [vmem:[#allocation8 + $0x48] sm:$0xff]
    %v317 = vld [vmem:[#allocation8 + $0x50] sm:$0xff]
    %v318 = vld [vmem:[#allocation8 + $0x58] sm:$0xff]
    %v319 = vld [vmem:[#allocation8 + $0x60] sm:$0xff]
    %v320 = vld [vmem:[#allocation8 + $0x68] sm:$0xff]
    %v321 = vld [vmem:[#allocation8 + $0x70] sm:$0xff]
    %v322 = vld [vmem:[#allocation8 + $0x78] sm:$0xff]
    %v323 = vld [vmem:[%s6] sm:$0x1]
    %v325 = vlaneseq
    %v326 = vshrl.u32 %v325, 7
    %v327 = vsub.s32 0, %v326
    %v328 = vrot.slane %v323, %v327
    %330 = vmatprep.subr.mxu0 0.0
    %331 = vmatpush1.msra.mxu0 %v322
    %332 = vmatprep.subr.mxu0 0.0
    %333 = vmatpush1.msra.mxu0 %v321
    %334 = vmatprep.subr.mxu0 0.0
    %335 = vmatpush1.msra.mxu0 %v320
    %336 = vmatprep.subr.mxu0 0.0
    %337 = vmatpush1.msra.mxu0 %v319
    %338 = vmatprep.subr.mxu0 0.0
    %339 = vmatpush1.msra.mxu0 %v318
    %340 = vmatprep.subr.mxu0 0.0
    %341 = vmatpush1.msra.mxu0 %v317
    %342 = vmatprep.subr.mxu0 0.0
    %343 = vmatpush1.msra.mxu0 %v316
    %344 = vmatprep.subr.mxu0 0.0
    %345 = vmatpush1.msra.mxu0 %v315
    %346 = vmatprep.subr.mxu0 0.0
    %347 = vmatpush1.msra.mxu0 %v314
    %348 = vmatprep.subr.mxu0 0.0
    %349 = vmatpush1.msra.mxu0 %v313
    %350 = vmatprep.subr.mxu0 0.0
    %351 = vmatpush1.msra.mxu0 %v312
    %352 = vmatprep.subr.mxu0 0.0
    %353 = vmatpush1.msra.mxu0 %v311
    %354 = vmatprep.subr.mxu0 0.0
    %355 = vmatpush1.msra.mxu0 %v310
    %356 = vmatprep.subr.mxu0 0.0
    %357 = vmatpush1.msra.mxu0 %v309
    %358 = vmatprep.subr.mxu0 0.0
    %359 = vmatpush1.msra.mxu0 %v308
    %360 = vmatprep.subr.mxu0 0.0
    %361 = vmatpush1.msra.mxu0 %v307
    %362 = vmatprep.subr.mxu0 0.0
    %363 = vmatpush2.msra.mxu0 0.0
    %364 = vmatprep.subr.mxu0 0.0
    %365 = vmatpush2.msra.mxu0 0.0
    %366 = vmatprep.subr.mxu0 0.0
    %367 = vmatpush2.msra.mxu0 0.0
    %368 = vmatprep.subr.mxu0 0.0
    %369 = vmatpush2.msra.mxu0 0.0
    %370 = vmatprep.subr.mxu0 0.0
    %371 = vmatpush2.msra.mxu0 0.0
    %372 = vmatprep.subr.mxu0 0.0
    %373 = vmatpush2.msra.mxu0 0.0
    %374 = vmatprep.subr.mxu0 0.0
    %375 = vmatpush2.msra.mxu0 0.0
    %376 = vmatprep.subr.mxu0 0.0
    %377 = vmatpush2.msra.mxu0 0.0
    %378 = vmatprep.subr.mxu0 0.0
    %379 = vmatpush2.msra.mxu0 0.0
    %380 = vmatprep.subr.mxu0 0.0
    %381 = vmatpush2.msra.mxu0 0.0
    %382 = vmatprep.subr.mxu0 0.0
    %383 = vmatpush2.msra.mxu0 0.0
    %384 = vmatprep.subr.mxu0 0.0
    %385 = vmatpush2.msra.mxu0 0.0
    %386 = vmatprep.subr.mxu0 0.0
    %387 = vmatpush2.msra.mxu0 0.0
    %388 = vmatprep.subr.mxu0 0.0
    %389 = vmatpush2.msra.mxu0 0.0
    %390 = vmatprep.subr.mxu0 0.0
    %391 = vmatpush2.msra.mxu0 0.0
    %392 = vmatprep.subr.mxu0 0.0
    %393 = vmatpush2.msra.mxu0 0.0
    %394 = vmatprep.mubr.f32.mxu0 0.0
    %395 = vmatmul.mubr.f32.gmra.mxu0 %v304
    %v396 = vpop.f32.mrf.mxu0
    %v397 = vadd.f32 %v328, %v396
    %v398 = vpop.f32.mrf.mxu0
    %399 = vdwg.mxu0
    %v400 = vxor.u32 %v397, 2147483648
    %v401 = vmul.f32 %v400, 1.442695
    %v402 = vpow.pop %v401
    %v403 = vadd.f32 %v402, 1.0
    %v404 = vrcp.pop %v403
    %v405 = vmul.f32 1.0, %v404
    %v406 = vsub.f32 %v304, %v80
    %v407 = vmul.f32 %v405, %v406
    %v408 = vadd.f32 %v80, %v407
    %409 = vst [vmem:[#allocation10] sm:$0xff] %v408
    // Predicated region
    $region46: #{tpu_custom_call.1} parent=1 // pred_check
      _
    $region47: #{tpu_custom_call.1} parent=1 // pred_check_branch
      %411 = sbr.rel (0) target = $region49
    $region48: #{tpu_custom_call.1} parent=1 // pred_region
      %s413 = ssub.s32 128, 128
      %414 = vsyncadd [#allocation4], %s413
      %s416 = sshll.u32 [#allocation10], 4
      %s417 = int_to_ptr.vmem [resolvable:$true] %s416
      %419 = dma.vmem_to_hbm [thread:$0]  %s417, 128, %s7, [#allocation4]
    $region49: #{tpu_custom_call.1} parent=1 // pred_fallthru
      _
    // Predicated region
    $region50: #{tpu_custom_call.1} parent=1 // pred_check
      _
    $region51: #{tpu_custom_call.1} parent=1 // pred_check_branch
      %421 = sbr.rel (0) target = $region53
    $region52: #{tpu_custom_call.1} parent=1 // pred_region
      %422 = dma.done [#allocation4], 128
    $region53: #{tpu_custom_call.1} parent=1 // pred_fallthru
      _
    %423 = vsyncpa [#allocation3], 1
    %424 = vsyncpa [#allocation6], 1
    %425 = vsyncpa [#allocation9], 1
    %426 = vsyncpa [#allocation4], 1

</llo_original>
